<compile_context>
chip_gen: v5e
topology: v5e:2x2
jax: 0.10.0
libtpu: 0.0.40
codegen_flags: <defaults>
</compile_context>

<pallas_src>
import functools

import jax
import jax.numpy as jnp
from jax.experimental import pallas as pl
from jax.experimental.pallas import tpu as pltpu

RAW = 200            # raw_size
FEAT = 60            # feat_size
HID = 22             # hidden_size (both MLPs)
POOLED = 2 * FEAT    # 120 = mean || std
OUT_LANES = 128      # lane-dense per-model output row (score broadcast)


# ---------------------------------------------------------------------------
# Fused kernel: raw->feat MLP + mean/std pooling + prediction head + sigmoid
# ---------------------------------------------------------------------------
def _fused_kernel(feats_ref,
                  w1, b1, w2, b2, w3, b3, w4, b4, w5, b5,
                  w6, b6, w7, b7,
                  out_ref, *, compute_dtype):
    mb, n, raw = feats_ref.shape

    def dense(x, w_ref, b_ref):
        # Weights arrive already in compute_dtype (cast hoisted to the wrapper);
        # accumulate in f32, add f32 bias.
        return jnp.dot(x.astype(compute_dtype), w_ref[...],
                       preferred_element_type=jnp.float32) + b_ref[...]

    # --- mlp_raw_to_feat over all mb*n rows at once (large-M matmuls) -------
    x = feats_ref[...].reshape(mb * n, raw)
    h = jnp.maximum(dense(x, w1, b1), 0.0)
    h = jnp.maximum(dense(h, w2, b2), 0.0)
    h = jnp.maximum(dense(h, w3, b3), 0.0)
    h = jnp.maximum(dense(h, w4, b4), 0.0)
    feat = dense(h, w5, b5)                              # (mb*n, FEAT) f32

    # --- intermediate(): per-model mean and unbiased (ddof=1) std -----------
    # Single pass: sum + sum-of-squares; clamp tiny negative cancellation.
    feat = feat.reshape(mb, n, FEAT)
    s1 = jnp.sum(feat, axis=1)                           # (mb, FEAT)
    s2 = jnp.sum(feat * feat, axis=1)                    # (mb, FEAT)
    mean = s1 * (1.0 / n)
    var = jnp.maximum(s2 - s1 * mean, 0.0) * (1.0 / (n - 1))
    std = jnp.sqrt(var)
    pooled = jnp.concatenate([mean, std], axis=1)        # (mb, POOLED) f32

    # --- mlp_feat_to_pred + sigmoid, fused per model -------------------------
    z = jnp.maximum(
        jnp.dot(pooled, w6[...], preferred_element_type=jnp.float32) + b6[...],
        0.0)
    logit = jnp.dot(z, w7[...], preferred_element_type=jnp.float32) + b7[...]
    score = jax.nn.sigmoid(logit)                        # (mb, 1)

    # Lane-dense unmasked store: broadcast the score across 128 lanes.
    out_ref[...] = jnp.broadcast_to(score, out_ref.shape)


# ---------------------------------------------------------------------------
# Generation-aware tiling
# ---------------------------------------------------------------------------
def _tpu_tile_config():
    """(target_rows, max_tile_bytes, vmem_limit_bytes), sized off physical VMEM."""
    try:
        vmem_cap = int(pltpu.get_tpu_info().vmem_capacity_bytes)
    except Exception:
        vmem_cap = 64 << 20                              # conservative (v7x-class)
    if vmem_cap <= (64 << 20):                           # v7x: 64 MiB per TC
        return 2048, 8 << 20, 48 << 20
    return 4096, 16 << 20, 96 << 20                      # v5e / v6e: 128 MiB


def _pick_block_b(batch, n, itemsize, target_rows, max_tile_bytes):
    """Models per grid step: fill the MXU M dim while keeping the per-buffer
    feats tile under max_tile_bytes (double-buffered by the pipeline)."""
    cap = max(1, max_tile_bytes // max(1, n * RAW * itemsize))
    mb = min(max(1, target_rows // max(1, n)), cap)
    if batch >= 16:
        # Guarantee >=2 grid steps so "parallel" can shard across v7x's 2 TCs.
        mb = min(mb, pl.cdiv(batch, 2))
    if mb >= batch:
        return batch                                     # single step, whole batch
    return max(8, (mb // 8) * 8)                         # out block needs mb % 8 == 0


# ---------------------------------------------------------------------------
# Wrapper
# ---------------------------------------------------------------------------
def nlp2023_meta_forward(feats, params, *, compute_dtype=jnp.float32):
    """feats: (B, N, RAW) float32/bfloat16 with N >= 2.  Returns (B, 1) scores."""
    B, N, raw = feats.shape
    assert raw == RAW
    if N < 2:
        raise ValueError("unbiased std (torch.std, ddof=1) needs N >= 2 rows per model")

    (w1, b1, w2, b2, w3, b3, w4, b4, w5, b5, w6, b6, w7, b7) = params
    if jnp.dtype(compute_dtype) != jnp.dtype(jnp.float32):
        # Hoist the weight cast out of the kernel (shared, unchanged per step).
        w1, w2, w3, w4, w5 = (w.astype(compute_dtype) for w in (w1, w2, w3, w4, w5))

    target_rows, max_tile_bytes, vmem_limit = _tpu_tile_config()
    mb = _pick_block_b(B, N, feats.dtype.itemsize, target_rows, max_tile_bytes)
    grid = (pl.cdiv(B, mb),)                             # ragged tail allowed: no jnp.pad

    all_params = (w1, b1, w2, b2, w3, b3, w4, b4, w5, b5, w6, b6, w7, b7)
    in_specs = [pl.BlockSpec((mb, N, RAW), lambda i: (i, 0, 0))]
    # Weights/biases are tiny: whole-array blocks, same block every step (no re-DMA).
    in_specs += [pl.BlockSpec(p.shape, lambda i: (0, 0)) for p in all_params]

    out = pl.pallas_call(
        functools.partial(_fused_kernel, compute_dtype=compute_dtype),
        out_shape=jax.ShapeDtypeStruct((B, OUT_LANES), jnp.float32),
        grid=grid,
        in_specs=in_specs,
        out_specs=pl.BlockSpec((mb, OUT_LANES), lambda i: (i, 0)),
        compiler_params=pltpu.CompilerParams(
            dimension_semantics=("parallel",),           # no cross-step state
            vmem_limit_bytes=vmem_limit,
        ),
    )(feats, *all_params)

    return out[:, :1]                                    # score lives in lane 0


# ---------------------------------------------------------------------------
# Synthetic params + plain-JAX reference for verification
# ---------------------------------------------------------------------------
def init_params(key):
    """Deterministic synthetic weights matching the module's Linear shapes."""
    dims = [
        (RAW, HID), (HID, HID), (HID, HID), (HID, HID), (HID, FEAT),   # mlp_raw_to_feat
        (POOLED, HID), (HID, 1),                                       # mlp_feat_to_pred
    ]
    params = []
    for din, dout in dims:
        key, kw, kb = jax.random.split(key, 3)
        scale = 1.0 / jnp.sqrt(jnp.float32(din))
        w = jax.random.uniform(kw, (din, dout), jnp.float32, -scale, scale)
        b = jax.random.uniform(kb, (1, dout), jnp.float32, -scale, scale)
        params += [w, b]
    return params


def reference_forward(feats, params):
    """Plain-JAX replica of NLP2023_Meta_LogFeats.forward for verification."""
    (w1, b1, w2, b2, w3, b3, w4, b4, w5, b5, w6, b6, w7, b7) = params

    def per_model(x):
        h = jax.nn.relu(x @ w1 + b1)
        h = jax.nn.relu(h @ w2 + b2)
        h = jax.nn.relu(h @ w3 + b3)
        h = jax.nn.relu(h @ w4 + b4)
        f = h @ w5 + b5
        mean = jnp.mean(f, axis=0, keepdims=True)
        std = jnp.std(f, axis=0, keepdims=True, ddof=1)
        return jnp.concatenate([mean, std], axis=1)

    h = jnp.concatenate([per_model(feats[i]) for i in range(feats.shape[0])], axis=0)
    z = jax.nn.relu(h @ w6 + b6)
    return jax.nn.sigmoid(z @ w7 + b7)


if __name__ == "__main__":
    key = jax.random.PRNGKey(0)
    key, kp, kx1, kx2 = jax.random.split(key, 4)
    params = init_params(kp)

    # Primary small case: 4 candidate models x 8 feature rows, single grid step.
    B1, N = 4, 8
    feats1 = jax.random.normal(kx1, (B1, N, RAW), jnp.float32)
    out1 = jax.block_until_ready(nlp2023_meta_forward(feats1, params))
    ref1 = reference_forward(feats1, params)
    assert out1.shape == (B1, 1)
    assert jnp.allclose(out1, ref1, atol=2e-5, rtol=2e-5), (out1, ref1)

    # Ragged multi-step case (B % mb != 0): exercises the pad-free tail path and
    # the >=2-grid-step (v7x megacore) path.
    B2 = 20
    feats2 = jax.random.normal(kx2, (B2, N, RAW), jnp.float32)
    out2 = jax.block_until_ready(nlp2023_meta_forward(feats2, params))
    ref2 = reference_forward(feats2, params)
    assert out2.shape == (B2, 1)
    assert jnp.allclose(out2, ref2, atol=2e-5, rtol=2e-5), (out2, ref2)

    # Optional bf16 path (MXU-native on v6e/v7x, halves the feats HBM stream);
    # checked loosely since bf16 numerics differ from the f32 reference by design.
    out_bf16 = jax.block_until_ready(
        nlp2023_meta_forward(feats1.astype(jnp.bfloat16), params,
                             compute_dtype=jnp.bfloat16))
    assert out_bf16.shape == (B1, 1)
    assert bool(jnp.isfinite(out_bf16).all())
    assert jnp.allclose(out_bf16, ref1, atol=1e-1)

    print("KERNEL_OK")
</pallas_src>

<mosaic_0001>
module attributes {stable_mosaic.version = 11 : i64} {
  func.func @_fused_kernel(%arg0: i32, %arg1: memref<4x8x200xf32, #tpu.memory_space<vmem>>, %arg2: memref<200x22xf32, #tpu.memory_space<vmem>>, %arg3: memref<1x22xf32, #tpu.memory_space<vmem>>, %arg4: memref<22x22xf32, #tpu.memory_space<vmem>>, %arg5: memref<1x22xf32, #tpu.memory_space<vmem>>, %arg6: memref<22x22xf32, #tpu.memory_space<vmem>>, %arg7: memref<1x22xf32, #tpu.memory_space<vmem>>, %arg8: memref<22x22xf32, #tpu.memory_space<vmem>>, %arg9: memref<1x22xf32, #tpu.memory_space<vmem>>, %arg10: memref<22x60xf32, #tpu.memory_space<vmem>>, %arg11: memref<1x60xf32, #tpu.memory_space<vmem>>, %arg12: memref<120x22xf32, #tpu.memory_space<vmem>>, %arg13: memref<1x22xf32, #tpu.memory_space<vmem>>, %arg14: memref<22x1xf32, #tpu.memory_space<vmem>>, %arg15: memref<1x1xf32, #tpu.memory_space<vmem>>, %arg16: memref<4x128xf32, #tpu.memory_space<vmem>>) attributes {dimension_semantics = [#tpu.dimension_semantics<parallel>], iteration_bounds = array<i64: 1>, scalar_prefetch = 0 : i64, scratch_operands = 0 : i64, tpu.core_type = #tpu.core_type<tc>, window_params = [{transform_indices = @transform_0, window_bounds = array<i64: 4, 8, 200>}, {pipeline_mode = #tpu.pipeline_mode<synchronous>, transform_indices = @transform_1, window_bounds = array<i64: 200, 22>}, {pipeline_mode = #tpu.pipeline_mode<synchronous>, transform_indices = @transform_2, window_bounds = array<i64: 1, 22>}, {pipeline_mode = #tpu.pipeline_mode<synchronous>, transform_indices = @transform_3, window_bounds = array<i64: 22, 22>}, {pipeline_mode = #tpu.pipeline_mode<synchronous>, transform_indices = @transform_4, window_bounds = array<i64: 1, 22>}, {pipeline_mode = #tpu.pipeline_mode<synchronous>, transform_indices = @transform_5, window_bounds = array<i64: 22, 22>}, {pipeline_mode = #tpu.pipeline_mode<synchronous>, transform_indices = @transform_6, window_bounds = array<i64: 1, 22>}, {pipeline_mode = #tpu.pipeline_mode<synchronous>, transform_indices = @transform_7, window_bounds = array<i64: 22, 22>}, {pipeline_mode = #tpu.pipeline_mode<synchronous>, transform_indices = @transform_8, window_bounds = array<i64: 1, 22>}, {pipeline_mode = #tpu.pipeline_mode<synchronous>, transform_indices = @transform_9, window_bounds = array<i64: 22, 60>}, {pipeline_mode = #tpu.pipeline_mode<synchronous>, transform_indices = @transform_10, window_bounds = array<i64: 1, 60>}, {pipeline_mode = #tpu.pipeline_mode<synchronous>, transform_indices = @transform_11, window_bounds = array<i64: 120, 22>}, {pipeline_mode = #tpu.pipeline_mode<synchronous>, transform_indices = @transform_12, window_bounds = array<i64: 1, 22>}, {pipeline_mode = #tpu.pipeline_mode<synchronous>, transform_indices = @transform_13, window_bounds = array<i64: 22, 1>}, {pipeline_mode = #tpu.pipeline_mode<synchronous>, transform_indices = @transform_14, window_bounds = array<i64: 1, 1>}, {transform_indices = @transform_15, window_bounds = array<i64: 4, 128>}]} {
    %c0 = arith.constant 0 : index
    %c0_0 = arith.constant 0 : index
    %c0_1 = arith.constant 0 : index
    %0 = vector.load %arg1[%c0, %c0_0, %c0_1] : memref<4x8x200xf32, #tpu.memory_space<vmem>>, vector<4x8x200xf32>
    %1 = vector.shape_cast %0 : vector<4x8x200xf32> to vector<32x200xf32>
    %c0_2 = arith.constant 0 : index
    %c0_3 = arith.constant 0 : index
    %2 = vector.load %arg2[%c0_2, %c0_3] : memref<200x22xf32, #tpu.memory_space<vmem>>, vector<200x22xf32>
    %cst = arith.constant dense<0.000000e+00> : vector<32x22xf32>
    %3 = tpu.matmul %1, %2, %cst {dimension_numbers = #tpu.dot_dimension_numbers<[1], [0], [0], [1], [0, 0, 1, 1], [], []>} : vector<32x200xf32>, vector<200x22xf32>, vector<32x22xf32> -> vector<32x22xf32>
    %c0_4 = arith.constant 0 : index
    %c0_5 = arith.constant 0 : index
    %4 = vector.load %arg3[%c0_4, %c0_5] : memref<1x22xf32, #tpu.memory_space<vmem>>, vector<1x22xf32>
    %5 = vector.broadcast %4 : vector<1x22xf32> to vector<32x22xf32>
    %6 = arith.addf %3, %5 : vector<32x22xf32>
    %cst_6 = arith.constant 0.000000e+00 : f32
    %7 = vector.broadcast %cst_6 : f32 to vector<32x22xf32>
    %8 = arith.maximumf %6, %7 : vector<32x22xf32>
    %c0_7 = arith.constant 0 : index
    %c0_8 = arith.constant 0 : index
    %9 = vector.load %arg4[%c0_7, %c0_8] : memref<22x22xf32, #tpu.memory_space<vmem>>, vector<22x22xf32>
    %cst_9 = arith.constant dense<0.000000e+00> : vector<32x22xf32>
    %10 = tpu.matmul %8, %9, %cst_9 {dimension_numbers = #tpu.dot_dimension_numbers<[1], [0], [0], [1], [0, 0, 1, 1], [], []>} : vector<32x22xf32>, vector<22x22xf32>, vector<32x22xf32> -> vector<32x22xf32>
    %c0_10 = arith.constant 0 : index
    %c0_11 = arith.constant 0 : index
    %11 = vector.load %arg5[%c0_10, %c0_11] : memref<1x22xf32, #tpu.memory_space<vmem>>, vector<1x22xf32>
    %12 = vector.broadcast %11 : vector<1x22xf32> to vector<32x22xf32>
    %13 = arith.addf %10, %12 : vector<32x22xf32>
    %cst_12 = arith.constant 0.000000e+00 : f32
    %14 = vector.broadcast %cst_12 : f32 to vector<32x22xf32>
    %15 = arith.maximumf %13, %14 : vector<32x22xf32>
    %c0_13 = arith.constant 0 : index
    %c0_14 = arith.constant 0 : index
    %16 = vector.load %arg6[%c0_13, %c0_14] : memref<22x22xf32, #tpu.memory_space<vmem>>, vector<22x22xf32>
    %cst_15 = arith.constant dense<0.000000e+00> : vector<32x22xf32>
    %17 = tpu.matmul %15, %16, %cst_15 {dimension_numbers = #tpu.dot_dimension_numbers<[1], [0], [0], [1], [0, 0, 1, 1], [], []>} : vector<32x22xf32>, vector<22x22xf32>, vector<32x22xf32> -> vector<32x22xf32>
    %c0_16 = arith.constant 0 : index
    %c0_17 = arith.constant 0 : index
    %18 = vector.load %arg7[%c0_16, %c0_17] : memref<1x22xf32, #tpu.memory_space<vmem>>, vector<1x22xf32>
    %19 = vector.broadcast %18 : vector<1x22xf32> to vector<32x22xf32>
    %20 = arith.addf %17, %19 : vector<32x22xf32>
    %cst_18 = arith.constant 0.000000e+00 : f32
    %21 = vector.broadcast %cst_18 : f32 to vector<32x22xf32>
    %22 = arith.maximumf %20, %21 : vector<32x22xf32>
    %c0_19 = arith.constant 0 : index
    %c0_20 = arith.constant 0 : index
    %23 = vector.load %arg8[%c0_19, %c0_20] : memref<22x22xf32, #tpu.memory_space<vmem>>, vector<22x22xf32>
    %cst_21 = arith.constant dense<0.000000e+00> : vector<32x22xf32>
    %24 = tpu.matmul %22, %23, %cst_21 {dimension_numbers = #tpu.dot_dimension_numbers<[1], [0], [0], [1], [0, 0, 1, 1], [], []>} : vector<32x22xf32>, vector<22x22xf32>, vector<32x22xf32> -> vector<32x22xf32>
    %c0_22 = arith.constant 0 : index
    %c0_23 = arith.constant 0 : index
    %25 = vector.load %arg9[%c0_22, %c0_23] : memref<1x22xf32, #tpu.memory_space<vmem>>, vector<1x22xf32>
    %26 = vector.broadcast %25 : vector<1x22xf32> to vector<32x22xf32>
    %27 = arith.addf %24, %26 : vector<32x22xf32>
    %cst_24 = arith.constant 0.000000e+00 : f32
    %28 = vector.broadcast %cst_24 : f32 to vector<32x22xf32>
    %29 = arith.maximumf %27, %28 : vector<32x22xf32>
    %c0_25 = arith.constant 0 : index
    %c0_26 = arith.constant 0 : index
    %30 = vector.load %arg10[%c0_25, %c0_26] : memref<22x60xf32, #tpu.memory_space<vmem>>, vector<22x60xf32>
    %cst_27 = arith.constant dense<0.000000e+00> : vector<32x60xf32>
    %31 = tpu.matmul %29, %30, %cst_27 {dimension_numbers = #tpu.dot_dimension_numbers<[1], [0], [0], [1], [0, 0, 1, 1], [], []>} : vector<32x22xf32>, vector<22x60xf32>, vector<32x60xf32> -> vector<32x60xf32>
    %c0_28 = arith.constant 0 : index
    %c0_29 = arith.constant 0 : index
    %32 = vector.load %arg11[%c0_28, %c0_29] : memref<1x60xf32, #tpu.memory_space<vmem>>, vector<1x60xf32>
    %33 = vector.broadcast %32 : vector<1x60xf32> to vector<32x60xf32>
    %34 = arith.addf %31, %33 : vector<32x60xf32>
    %35 = vector.shape_cast %34 : vector<32x60xf32> to vector<4x8x60xf32>
    %cst_30 = arith.constant dense<0.000000e+00> : vector<4x60xf32>
    %36 = vector.multi_reduction <add>, %35, %cst_30 [1] : vector<4x8x60xf32> to vector<4x60xf32>
    %37 = arith.mulf %35, %35 : vector<4x8x60xf32>
    %cst_31 = arith.constant dense<0.000000e+00> : vector<4x60xf32>
    %38 = vector.multi_reduction <add>, %37, %cst_31 [1] : vector<4x8x60xf32> to vector<4x60xf32>
    %cst_32 = arith.constant 1.250000e-01 : f32
    %39 = vector.broadcast %cst_32 : f32 to vector<4x60xf32>
    %40 = arith.mulf %36, %39 : vector<4x60xf32>
    %41 = arith.mulf %36, %40 : vector<4x60xf32>
    %42 = arith.subf %38, %41 : vector<4x60xf32>
    %cst_33 = arith.constant 0.000000e+00 : f32
    %43 = vector.broadcast %cst_33 : f32 to vector<4x60xf32>
    %44 = arith.maximumf %42, %43 : vector<4x60xf32>
    %cst_34 = arith.constant 0.142857149 : f32
    %45 = vector.broadcast %cst_34 : f32 to vector<4x60xf32>
    %46 = arith.mulf %44, %45 : vector<4x60xf32>
    %47 = math.sqrt %46 : vector<4x60xf32>
    %48 = tpu.concatenate %40, %47 in 1 : vector<4x60xf32>, vector<4x60xf32> -> vector<4x120xf32>
    %c0_35 = arith.constant 0 : index
    %c0_36 = arith.constant 0 : index
    %49 = vector.load %arg12[%c0_35, %c0_36] : memref<120x22xf32, #tpu.memory_space<vmem>>, vector<120x22xf32>
    %cst_37 = arith.constant dense<0.000000e+00> : vector<4x22xf32>
    %50 = tpu.matmul %48, %49, %cst_37 {dimension_numbers = #tpu.dot_dimension_numbers<[1], [0], [0], [1], [0, 0, 1, 1], [], []>} : vector<4x120xf32>, vector<120x22xf32>, vector<4x22xf32> -> vector<4x22xf32>
    %c0_38 = arith.constant 0 : index
    %c0_39 = arith.constant 0 : index
    %51 = vector.load %arg13[%c0_38, %c0_39] : memref<1x22xf32, #tpu.memory_space<vmem>>, vector<1x22xf32>
    %52 = vector.broadcast %51 : vector<1x22xf32> to vector<4x22xf32>
    %53 = arith.addf %50, %52 : vector<4x22xf32>
    %cst_40 = arith.constant 0.000000e+00 : f32
    %54 = vector.broadcast %cst_40 : f32 to vector<4x22xf32>
    %55 = arith.maximumf %53, %54 : vector<4x22xf32>
    %c0_41 = arith.constant 0 : index
    %c0_42 = arith.constant 0 : index
    %56 = vector.load %arg14[%c0_41, %c0_42] : memref<22x1xf32, #tpu.memory_space<vmem>>, vector<22x1xf32>
    %cst_43 = arith.constant dense<0.000000e+00> : vector<4x1xf32>
    %57 = tpu.matmul %55, %56, %cst_43 {dimension_numbers = #tpu.dot_dimension_numbers<[1], [0], [0], [1], [0, 0, 1, 1], [], []>} : vector<4x22xf32>, vector<22x1xf32>, vector<4x1xf32> -> vector<4x1xf32>
    %c0_44 = arith.constant 0 : index
    %c0_45 = arith.constant 0 : index
    %58 = vector.load %arg15[%c0_44, %c0_45] : memref<1x1xf32, #tpu.memory_space<vmem>>, vector<1x1xf32>
    %59 = vector.broadcast %58 : vector<1x1xf32> to vector<4x1xf32>
    %60 = arith.addf %57, %59 : vector<4x1xf32>
    %61 = arith.negf %60 : vector<4x1xf32>
    %62 = math.exp %61 : vector<4x1xf32>
    %cst_46 = arith.constant 1.000000e+00 : f32
    %63 = vector.broadcast %cst_46 : f32 to vector<4x1xf32>
    %64 = arith.addf %63, %62 : vector<4x1xf32>
    %65 = arith.divf %63, %64 : vector<4x1xf32>
    %66 = vector.shape_cast %65 : vector<4x1xf32> to vector<4x1xf32>
    %67 = vector.broadcast %66 : vector<4x1xf32> to vector<4x128xf32>
    %c0_47 = arith.constant 0 : index
    %c0_48 = arith.constant 0 : index
    %68 = vector.load %arg16[%c0_47, %c0_48] : memref<4x128xf32, #tpu.memory_space<vmem>>, vector<4x128xf32>
    tpu.vector_store %arg16[%c0_47, %c0_48], %67 {strides = array<i32>} : memref<4x128xf32, #tpu.memory_space<vmem>>, vector<4x128xf32>,
    return
  }
  func.func @transform_0(%arg0: i32) -> (i32, i32, i32) {
    %c0_i32 = arith.constant 0 : i32
    %c0_i32_0 = arith.constant 0 : i32
    %c0_i32_1 = arith.constant 0 : i32
    return %arg0, %c0_i32, %c0_i32_0 : i32, i32, i32
  }
  func.func @transform_1(%arg0: i32) -> (i32, i32) {
    %c0_i32 = arith.constant 0 : i32
    %c0_i32_0 = arith.constant 0 : i32
    %c0_i32_1 = arith.constant 0 : i32
    return %c0_i32, %c0_i32_0 : i32, i32
  }
  func.func @transform_2(%arg0: i32) -> (i32, i32) {
    %c0_i32 = arith.constant 0 : i32
    %c0_i32_0 = arith.constant 0 : i32
    %c0_i32_1 = arith.constant 0 : i32
    return %c0_i32, %c0_i32_0 : i32, i32
  }
  func.func @transform_3(%arg0: i32) -> (i32, i32) {
    %c0_i32 = arith.constant 0 : i32
    %c0_i32_0 = arith.constant 0 : i32
    %c0_i32_1 = arith.constant 0 : i32
    return %c0_i32, %c0_i32_0 : i32, i32
  }
  func.func @transform_4(%arg0: i32) -> (i32, i32) {
    %c0_i32 = arith.constant 0 : i32
    %c0_i32_0 = arith.constant 0 : i32
    %c0_i32_1 = arith.constant 0 : i32
    return %c0_i32, %c0_i32_0 : i32, i32
  }
  func.func @transform_5(%arg0: i32) -> (i32, i32) {
    %c0_i32 = arith.constant 0 : i32
    %c0_i32_0 = arith.constant 0 : i32
    %c0_i32_1 = arith.constant 0 : i32
    return %c0_i32, %c0_i32_0 : i32, i32
  }
  func.func @transform_6(%arg0: i32) -> (i32, i32) {
    %c0_i32 = arith.constant 0 : i32
    %c0_i32_0 = arith.constant 0 : i32
    %c0_i32_1 = arith.constant 0 : i32
    return %c0_i32, %c0_i32_0 : i32, i32
  }
  func.func @transform_7(%arg0: i32) -> (i32, i32) {
    %c0_i32 = arith.constant 0 : i32
    %c0_i32_0 = arith.constant 0 : i32
    %c0_i32_1 = arith.constant 0 : i32
    return %c0_i32, %c0_i32_0 : i32, i32
  }
  func.func @transform_8(%arg0: i32) -> (i32, i32) {
    %c0_i32 = arith.constant 0 : i32
    %c0_i32_0 = arith.constant 0 : i32
    %c0_i32_1 = arith.constant 0 : i32
    return %c0_i32, %c0_i32_0 : i32, i32
  }
  func.func @transform_9(%arg0: i32) -> (i32, i32) {
    %c0_i32 = arith.constant 0 : i32
    %c0_i32_0 = arith.constant 0 : i32
    %c0_i32_1 = arith.constant 0 : i32
    return %c0_i32, %c0_i32_0 : i32, i32
  }
  func.func @transform_10(%arg0: i32) -> (i32, i32) {
    %c0_i32 = arith.constant 0 : i32
    %c0_i32_0 = arith.constant 0 : i32
    %c0_i32_1 = arith.constant 0 : i32
    return %c0_i32, %c0_i32_0 : i32, i32
  }
  func.func @transform_11(%arg0: i32) -> (i32, i32) {
    %c0_i32 = arith.constant 0 : i32
    %c0_i32_0 = arith.constant 0 : i32
    %c0_i32_1 = arith.constant 0 : i32
    return %c0_i32, %c0_i32_0 : i32, i32
  }
  func.func @transform_12(%arg0: i32) -> (i32, i32) {
    %c0_i32 = arith.constant 0 : i32
    %c0_i32_0 = arith.constant 0 : i32
    %c0_i32_1 = arith.constant 0 : i32
    return %c0_i32, %c0_i32_0 : i32, i32
  }
  func.func @transform_13(%arg0: i32) -> (i32, i32) {
    %c0_i32 = arith.constant 0 : i32
    %c0_i32_0 = arith.constant 0 : i32
    %c0_i32_1 = arith.constant 0 : i32
    return %c0_i32, %c0_i32_0 : i32, i32
  }
  func.func @transform_14(%arg0: i32) -> (i32, i32) {
    %c0_i32 = arith.constant 0 : i32
    %c0_i32_0 = arith.constant 0 : i32
    %c0_i32_1 = arith.constant 0 : i32
    return %c0_i32, %c0_i32_0 : i32, i32
  }
  func.func @transform_15(%arg0: i32) -> (i32, i32) {
    %c0_i32 = arith.constant 0 : i32
    %c0_i32_0 = arith.constant 0 : i32
    return %arg0, %c0_i32 : i32, i32
  }
}

</mosaic_0001>

<llo_original>
// kernel: tpu_custom_call.1
$region0: #{tpu_custom_call.1}
  #allocation0 [shape = 'u32[]', space=smem, size = 0x4, offset = 0x4, fixed_abs, tag = 'smem constant byte address 0x4 - core index']
  #allocation1 [shape = 'u32[72,128]{1,0:T(1,128)}', space=vmem, size = 0x9000, scoped, tag = 'internal scratch']
  #allocation2 [shape = 'f32[1,1]{1,0:T(1,128)S(1)}', space=vmem, size = 0x200, scoped, tag = 'scoped memory for tpu_custom_call.1']
  %s0 = inlined_call_operand.vmem [shape: f32[4,8,200], index: 0, kind: input, shape index: {}]
  %s1 = inlined_call_operand.vmem [shape: f32[200,22], index: 1, kind: input, shape index: {}]
  %s2 = inlined_call_operand.vmem [shape: f32[1,22], index: 2, kind: input, shape index: {}]
  %s3 = inlined_call_operand.vmem [shape: f32[22,22], index: 3, kind: input, shape index: {}]
  %s4 = inlined_call_operand.vmem [shape: f32[1,22], index: 4, kind: input, shape index: {}]
  %s5 = inlined_call_operand.vmem [shape: f32[22,22], index: 5, kind: input, shape index: {}]
  %s6 = inlined_call_operand.vmem [shape: f32[1,22], index: 6, kind: input, shape index: {}]
  %s7 = inlined_call_operand.vmem [shape: f32[22,22], index: 7, kind: input, shape index: {}]
  %s8 = inlined_call_operand.vmem [shape: f32[1,22], index: 8, kind: input, shape index: {}]
  %s9 = inlined_call_operand.vmem [shape: f32[22,60], index: 9, kind: input, shape index: {}]
  %s10 = inlined_call_operand.vmem [shape: f32[1,60], index: 10, kind: input, shape index: {}]
  %s11 = inlined_call_operand.vmem [shape: f32[120,22], index: 11, kind: input, shape index: {}]
  %s12 = inlined_call_operand.vmem [shape: f32[1,22], index: 12, kind: input, shape index: {}]
  %s13 = inlined_call_operand.vmem [shape: f32[22,1], index: 13, kind: input, shape index: {}]
  %s14 = inlined_call_operand.<no memory space> [shape: f32[1,1], index: 14, kind: input, shape index: {}]
  %s15 = inlined_call_operand.hbm [shape: f32[4,128], index: 15, kind: output, shape index: {}]
  %s16 = sld [smem:[#allocation0]]
  $region70: #{tpu_custom_call.1} parent=0
    _
  %s18 = ssub.s32 1, %s16
  %s19 = scalar_select 0, %s18, %s16
  %v20 = vstv %s14
  %21 = vst [vmem:[#allocation2] sm:$0x1] %v20
  $region1: #{tpu_custom_call.1} parent=0
    #allocation3 [shape = 'u8[2048]{0}', space=vmem, size = 0x800, scoped, tag = 'output window, operand 0, single buffered']
    #allocation4 [shape = 's32[1]{0}', space=sflag, size = 0x4, scoped, tag = 'scoped memory for tpu_custom_call.1']
    %22 = vsyncpa [#allocation4], 0
    // Predicated region
    $region2: #{tpu_custom_call.1} parent=1 // pred_check
      _
    $region3: #{tpu_custom_call.1} parent=1 // pred_check_branch
      %24 = sbr.rel (0) target = $region5
    $region4: #{tpu_custom_call.1} parent=1 // pred_region
      _
    $region5: #{tpu_custom_call.1} parent=1 // pred_fallthru
      _
    // Predicated region
    $region6: #{tpu_custom_call.1} parent=1 // pred_check
      _
    $region7: #{tpu_custom_call.1} parent=1 // pred_check_branch
      %26 = sbr.rel (0) target = $region9
    $region8: #{tpu_custom_call.1} parent=1 // pred_region
      _
    $region9: #{tpu_custom_call.1} parent=1 // pred_fallthru
      _
    // Predicated region
    $region10: #{tpu_custom_call.1} parent=1 // pred_check
      _
    $region11: #{tpu_custom_call.1} parent=1 // pred_check_branch
      %28 = sbr.rel (0) target = $region13
    $region12: #{tpu_custom_call.1} parent=1 // pred_region
      _
    $region13: #{tpu_custom_call.1} parent=1 // pred_fallthru
      _
    // Predicated region
    $region14: #{tpu_custom_call.1} parent=1 // pred_check
      _
    $region15: #{tpu_custom_call.1} parent=1 // pred_check_branch
      %30 = sbr.rel (0) target = $region17
    $region16: #{tpu_custom_call.1} parent=1 // pred_region
      _
    $region17: #{tpu_custom_call.1} parent=1 // pred_fallthru
      _
    // Predicated region
    $region18: #{tpu_custom_call.1} parent=1 // pred_check
      _
    $region19: #{tpu_custom_call.1} parent=1 // pred_check_branch
      %32 = sbr.rel (0) target = $region21
    $region20: #{tpu_custom_call.1} parent=1 // pred_region
      _
    $region21: #{tpu_custom_call.1} parent=1 // pred_fallthru
      _
    // Predicated region
    $region22: #{tpu_custom_call.1} parent=1 // pred_check
      _
    $region23: #{tpu_custom_call.1} parent=1 // pred_check_branch
      %34 = sbr.rel (0) target = $region25
    $region24: #{tpu_custom_call.1} parent=1 // pred_region
      _
    $region25: #{tpu_custom_call.1} parent=1 // pred_fallthru
      _
    // Predicated region
    $region26: #{tpu_custom_call.1} parent=1 // pred_check
      _
    $region27: #{tpu_custom_call.1} parent=1 // pred_check_branch
      %36 = sbr.rel (0) target = $region29
    $region28: #{tpu_custom_call.1} parent=1 // pred_region
      _
    $region29: #{tpu_custom_call.1} parent=1 // pred_fallthru
      _
    // Predicated region
    $region30: #{tpu_custom_call.1} parent=1 // pred_check
      _
    $region31: #{tpu_custom_call.1} parent=1 // pred_check_branch
      %38 = sbr.rel (0) target = $region33
    $region32: #{tpu_custom_call.1} parent=1 // pred_region
      _
    $region33: #{tpu_custom_call.1} parent=1 // pred_fallthru
      _
    // Predicated region
    $region34: #{tpu_custom_call.1} parent=1 // pred_check
      _
    $region35: #{tpu_custom_call.1} parent=1 // pred_check_branch
      %40 = sbr.rel (0) target = $region37
    $region36: #{tpu_custom_call.1} parent=1 // pred_region
      _
    $region37: #{tpu_custom_call.1} parent=1 // pred_fallthru
      _
    // Predicated region
    $region38: #{tpu_custom_call.1} parent=1 // pred_check
      _
    $region39: #{tpu_custom_call.1} parent=1 // pred_check_branch
      %42 = sbr.rel (0) target = $region41
    $region40: #{tpu_custom_call.1} parent=1 // pred_region
      _
    $region41: #{tpu_custom_call.1} parent=1 // pred_fallthru
      _
    // Predicated region
    $region42: #{tpu_custom_call.1} parent=1 // pred_check
      _
    $region43: #{tpu_custom_call.1} parent=1 // pred_check_branch
      %44 = sbr.rel (0) target = $region45
    $region44: #{tpu_custom_call.1} parent=1 // pred_region
      _
    $region45: #{tpu_custom_call.1} parent=1 // pred_fallthru
      _
    // Predicated region
    $region46: #{tpu_custom_call.1} parent=1 // pred_check
      _
    $region47: #{tpu_custom_call.1} parent=1 // pred_check_branch
      %46 = sbr.rel (0) target = $region49
    $region48: #{tpu_custom_call.1} parent=1 // pred_region
      _
    $region49: #{tpu_custom_call.1} parent=1 // pred_fallthru
      _
    // Predicated region
    $region50: #{tpu_custom_call.1} parent=1 // pred_check
      _
    $region51: #{tpu_custom_call.1} parent=1 // pred_check_branch
      %48 = sbr.rel (0) target = $region53
    $region52: #{tpu_custom_call.1} parent=1 // pred_region
      _
    $region53: #{tpu_custom_call.1} parent=1 // pred_fallthru
      _
    // Predicated region
    $region54: #{tpu_custom_call.1} parent=1 // pred_check
      _
    $region55: #{tpu_custom_call.1} parent=1 // pred_check_branch
      %50 = sbr.rel (0) target = $region57
    $region56: #{tpu_custom_call.1} parent=1 // pred_region
      _
    $region57: #{tpu_custom_call.1} parent=1 // pred_fallthru
      _
    // Predicated region
    $region58: #{tpu_custom_call.1} parent=1 // pred_check
      _
    $region59: #{tpu_custom_call.1} parent=1 // pred_check_branch
      %52 = sbr.rel (0) target = $region61
    $region60: #{tpu_custom_call.1} parent=1 // pred_region
      _
    $region61: #{tpu_custom_call.1} parent=1 // pred_fallthru
      _
    %v53 = vld [vmem:[%s0] sm:$0xff]
    %v54 = vld [vmem:[%s0 + $0x8] sm:$0xff]
    %v55 = vld [vmem:[%s0 + $0x10] sm:$0xff]
    %v56 = vld [vmem:[%s0 + $0x18] sm:$0xff]
    %v57 = vld [vmem:[%s0 + $0x20] sm:$0xff]
    %v58 = vld [vmem:[%s0 + $0x28] sm:$0xff]
    %v59 = vld [vmem:[%s0 + $0x30] sm:$0xff]
    %v60 = vld [vmem:[%s0 + $0x38] sm:$0xff]
    %v61 = vld [vmem:[%s1] sm:$0xff]
    %v62 = vld [vmem:[%s1 + $0x8] sm:$0xff]
    %v63 = vld [vmem:[%s1 + $0x10] sm:$0xff]
    %v64 = vld [vmem:[%s1 + $0x18] sm:$0xff]
    %v65 = vld [vmem:[%s1 + $0x20] sm:$0xff]
    %v66 = vld [vmem:[%s1 + $0x28] sm:$0xff]
    %v67 = vld [vmem:[%s1 + $0x30] sm:$0xff]
    %v68 = vld [vmem:[%s1 + $0x38] sm:$0xff]
    %v69 = vld [vmem:[%s1 + $0x40] sm:$0xff]
    %v70 = vld [vmem:[%s1 + $0x48] sm:$0xff]
    %v71 = vld [vmem:[%s1 + $0x50] sm:$0xff]
    %v72 = vld [vmem:[%s1 + $0x58] sm:$0xff]
    %v73 = vld [vmem:[%s1 + $0x60] sm:$0xff]
    %v74 = vld [vmem:[%s1 + $0x68] sm:$0xff]
    %v75 = vld [vmem:[%s1 + $0x70] sm:$0xff]
    %v76 = vld [vmem:[%s1 + $0x78] sm:$0xff]
    %v77 = vld [vmem:[%s1 + $0x80] sm:$0xff]
    %v78 = vld [vmem:[%s1 + $0x88] sm:$0xff]
    %v79 = vld [vmem:[%s1 + $0x90] sm:$0xff]
    %v80 = vld [vmem:[%s1 + $0x98] sm:$0xff]
    %v81 = vld [vmem:[%s1 + $0xa0] sm:$0xff]
    %v82 = vld [vmem:[%s1 + $0xa8] sm:$0xff]
    %v83 = vld [vmem:[%s1 + $0xb0] sm:$0xff]
    %v84 = vld [vmem:[%s1 + $0xb8] sm:$0xff]
    %v85 = vld [vmem:[%s1 + $0xc0] sm:$0xff]
    %v86 = vld [vmem:[%s2] sm:$0x1]
    %v88 = vperm.slane %v86, 0
    %vm90 = vcmask 588800
    %v92 = vsel %vm90, %v54, 0
    %v95 = vsel %vm90, %v56, 0
    %v98 = vsel %vm90, %v58, 0
    %v101 = vsel %vm90, %v60, 0
    %103 = vmatpush.msra.mxu0 %v76
    %104 = vmatpush.msra.mxu0 %v75
    %105 = vmatpush.msra.mxu0 %v74
    %106 = vmatpush.msra.mxu0 %v73
    %107 = vmatpush.msra.mxu0 %v72
    %108 = vmatpush.msra.mxu0 %v71
    %109 = vmatpush.msra.mxu0 %v70
    %110 = vmatpush.msra.mxu0 %v69
    %111 = vmatpush.msra.mxu0 %v68
    %112 = vmatpush.msra.mxu0 %v67
    %113 = vmatpush.msra.mxu0 %v66
    %114 = vmatpush.msra.mxu0 %v65
    %115 = vmatpush.msra.mxu0 %v64
    %116 = vmatpush.msra.mxu0 %v63
    %117 = vmatpush.msra.mxu0 %v62
    %118 = vmatpush.msra.mxu0 %v61
    %119 = vmatmul.f32.gmra.mxu0 %v53
    %v120 = vpop.f32.mrf.mxu0
    %v121 = vadd.f32 %v88, %v120
    %122 = vmatmul.f32.gmra.mxu0 %v55
    %v123 = vpop.f32.mrf.mxu0
    %v124 = vadd.f32 %v88, %v123
    %125 = vmatmul.f32.gmra.mxu0 %v57
    %v126 = vpop.f32.mrf.mxu0
    %v127 = vadd.f32 %v88, %v126
    %128 = vmatmul.f32.gmra.mxu0 %v59
    %v129 = vpop.f32.mrf.mxu0
    %v130 = vadd.f32 %v88, %v129
    %131 = vdwg.mxu0
    %132 = vmatpush.msra.mxu0 0.0
    %133 = vmatpush.msra.mxu0 0.0
    %134 = vmatpush.msra.mxu0 0.0
    %135 = vmatpush.msra.mxu0 0.0
    %136 = vmatpush.msra.mxu0 0.0
    %137 = vmatpush.msra.mxu0 0.0
    %138 = vmatpush.msra.mxu0 0.0
    %139 = vmatpush.msra.mxu0 %v85
    %140 = vmatpush.msra.mxu0 %v84
    %141 = vmatpush.msra.mxu0 %v83
    %142 = vmatpush.msra.mxu0 %v82
    %143 = vmatpush.msra.mxu0 %v81
    %144 = vmatpush.msra.mxu0 %v80
    %145 = vmatpush.msra.mxu0 %v79
    %146 = vmatpush.msra.mxu0 %v78
    %147 = vmatpush.msra.mxu0 %v77
    %148 = vmatmul.f32.gmra.mxu0 %v92
    %v149 = vpop.f32.mrf.mxu0
    %v150 = vadd.f32 %v121, %v149
    %151 = vmatmul.f32.gmra.mxu0 %v95
    %v152 = vpop.f32.mrf.mxu0
    %v153 = vadd.f32 %v124, %v152
    %154 = vmatmul.f32.gmra.mxu0 %v98
    %v155 = vpop.f32.mrf.mxu0
    %v156 = vadd.f32 %v127, %v155
    %157 = vmatmul.f32.gmra.mxu0 %v101
    %v158 = vpop.f32.mrf.mxu0
    %v159 = vadd.f32 %v130, %v158
    %160 = vdwg.mxu0
    %v161 = vmax.f32 %v150, 0.0
    %v162 = vmax.f32 %v153, 0.0
    %v163 = vmax.f32 %v156, 0.0
    %v164 = vmax.f32 %v159, 0.0
    %v165 = vld [vmem:[%s3] sm:$0xff]
    %v166 = vld [vmem:[%s3 + $0x8] sm:$0xff]
    %v167 = vld [vmem:[%s3 + $0x10] sm:$0x3f]
    %v168 = vld [vmem:[%s4] sm:$0x1]
    %v170 = vperm.slane %v168, 0
    %vm172 = vcmask 179200
    %v174 = vsel %vm172, %v161, 0
    %v177 = vsel %vm172, %v162, 0
    %v180 = vsel %vm172, %v163, 0
    %v183 = vsel %vm172, %v164, 0
    %vm185 = vcmask 1045504
    %v187 = vsel %vm185, %v167, 0
    %189 = vmatpush.msra.mxu0 0.0
    %190 = vmatpush.msra.mxu0 0.0
    %191 = vmatpush.msra.mxu0 0.0
    %192 = vmatpush.msra.mxu0 0.0
    %193 = vmatpush.msra.mxu0 0.0
    %194 = vmatpush.msra.mxu0 0.0
    %195 = vmatpush.msra.mxu0 0.0
    %196 = vmatpush.msra.mxu0 0.0
    %197 = vmatpush.msra.mxu0 0.0
    %198 = vmatpush.msra.mxu0 0.0
    %199 = vmatpush.msra.mxu0 0.0
    %200 = vmatpush.msra.mxu0 0.0
    %201 = vmatpush.msra.mxu0 0.0
    %202 = vmatpush.msra.mxu0 %v187
    %203 = vmatpush.msra.mxu0 %v166
    %204 = vmatpush.msra.mxu0 %v165
    %205 = vmatmul.f32.gmra.mxu0 %v174
    %v206 = vpop.f32.mrf.mxu0
    %v207 = vadd.f32 %v170, %v206
    %208 = vmatmul.f32.gmra.mxu0 %v177
    %v209 = vpop.f32.mrf.mxu0
    %v210 = vadd.f32 %v170, %v209
    %211 = vmatmul.f32.gmra.mxu0 %v180
    %v212 = vpop.f32.mrf.mxu0
    %v213 = vadd.f32 %v170, %v212
    %214 = vmatmul.f32.gmra.mxu0 %v183
    %v215 = vpop.f32.mrf.mxu0
    %v216 = vadd.f32 %v170, %v215
    %217 = vdwg.mxu0
    %v218 = vmax.f32 %v207, 0.0
    %v219 = vmax.f32 %v210, 0.0
    %v220 = vmax.f32 %v213, 0.0
    %v221 = vmax.f32 %v216, 0.0
    %v222 = vld [vmem:[%s5] sm:$0xff]
    %v223 = vld [vmem:[%s5 + $0x8] sm:$0xff]
    %v224 = vld [vmem:[%s5 + $0x10] sm:$0x3f]
    %v225 = vld [vmem:[%s6] sm:$0x1]
    %v227 = vperm.slane %v225, 0
    %v230 = vsel %vm172, %v218, 0
    %v233 = vsel %vm172, %v219, 0
    %v236 = vsel %vm172, %v220, 0
    %v239 = vsel %vm172, %v221, 0
    %v242 = vsel %vm185, %v224, 0
    %244 = vmatpush.msra.mxu0 0.0
    %245 = vmatpush.msra.mxu0 0.0
    %246 = vmatpush.msra.mxu0 0.0
    %247 = vmatpush.msra.mxu0 0.0
    %248 = vmatpush.msra.mxu0 0.0
    %249 = vmatpush.msra.mxu0 0.0
    %250 = vmatpush.msra.mxu0 0.0
    %251 = vmatpush.msra.mxu0 0.0
    %252 = vmatpush.msra.mxu0 0.0
    %253 = vmatpush.msra.mxu0 0.0
    %254 = vmatpush.msra.mxu0 0.0
    %255 = vmatpush.msra.mxu0 0.0
    %256 = vmatpush.msra.mxu0 0.0
    %257 = vmatpush.msra.mxu0 %v242
    %258 = vmatpush.msra.mxu0 %v223
    %259 = vmatpush.msra.mxu0 %v222
    %260 = vmatmul.f32.gmra.mxu0 %v230
    %v261 = vpop.f32.mrf.mxu0
    %v262 = vadd.f32 %v227, %v261
    %263 = vmatmul.f32.gmra.mxu0 %v233
    %v264 = vpop.f32.mrf.mxu0
    %v265 = vadd.f32 %v227, %v264
    %266 = vmatmul.f32.gmra.mxu0 %v236
    %v267 = vpop.f32.mrf.mxu0
    %v268 = vadd.f32 %v227, %v267
    %269 = vmatmul.f32.gmra.mxu0 %v239
    %v270 = vpop.f32.mrf.mxu0
    %v271 = vadd.f32 %v227, %v270
    %272 = vdwg.mxu0
    %v273 = vmax.f32 %v262, 0.0
    %v274 = vmax.f32 %v265, 0.0
    %v275 = vmax.f32 %v268, 0.0
    %v276 = vmax.f32 %v271, 0.0
    %v277 = vld [vmem:[%s7] sm:$0xff]
    %v278 = vld [vmem:[%s7 + $0x8] sm:$0xff]
    %v279 = vld [vmem:[%s7 + $0x10] sm:$0x3f]
    %v280 = vld [vmem:[%s8] sm:$0x1]
    %v282 = vperm.slane %v280, 0
    %v285 = vsel %vm172, %v273, 0
    %v288 = vsel %vm172, %v274, 0
    %v291 = vsel %vm172, %v275, 0
    %v294 = vsel %vm172, %v276, 0
    %v297 = vsel %vm185, %v279, 0
    %299 = vmatpush.msra.mxu0 0.0
    %300 = vmatpush.msra.mxu0 0.0
    %301 = vmatpush.msra.mxu0 0.0
    %302 = vmatpush.msra.mxu0 0.0
    %303 = vmatpush.msra.mxu0 0.0
    %304 = vmatpush.msra.mxu0 0.0
    %305 = vmatpush.msra.mxu0 0.0
    %306 = vmatpush.msra.mxu0 0.0
    %307 = vmatpush.msra.mxu0 0.0
    %308 = vmatpush.msra.mxu0 0.0
    %309 = vmatpush.msra.mxu0 0.0
    %310 = vmatpush.msra.mxu0 0.0
    %311 = vmatpush.msra.mxu0 0.0
    %312 = vmatpush.msra.mxu0 %v297
    %313 = vmatpush.msra.mxu0 %v278
    %314 = vmatpush.msra.mxu0 %v277
    %315 = vmatmul.f32.gmra.mxu0 %v285
    %v316 = vpop.f32.mrf.mxu0
    %v317 = vadd.f32 %v282, %v316
    %318 = vmatmul.f32.gmra.mxu0 %v288
    %v319 = vpop.f32.mrf.mxu0
    %v320 = vadd.f32 %v282, %v319
    %321 = vmatmul.f32.gmra.mxu0 %v291
    %v322 = vpop.f32.mrf.mxu0
    %v323 = vadd.f32 %v282, %v322
    %324 = vmatmul.f32.gmra.mxu0 %v294
    %v325 = vpop.f32.mrf.mxu0
    %v326 = vadd.f32 %v282, %v325
    %327 = vdwg.mxu0
    %v328 = vmax.f32 %v317, 0.0
    %v329 = vmax.f32 %v320, 0.0
    %v330 = vmax.f32 %v323, 0.0
    %v331 = vmax.f32 %v326, 0.0
    %v332 = vld [vmem:[%s9] sm:$0xff]
    %v333 = vld [vmem:[%s9 + $0x8] sm:$0xff]
    %v334 = vld [vmem:[%s9 + $0x10] sm:$0x3f]
    %v335 = vld [vmem:[%s10] sm:$0x1]
    %v337 = vperm.slane %v335, 0
    %v340 = vsel %vm172, %v328, 0
    %v343 = vsel %vm172, %v329, 0
    %v346 = vsel %vm172, %v330, 0
    %v349 = vsel %vm172, %v331, 0
    %v352 = vsel %vm185, %v334, 0
    %354 = vmatpush.msra.mxu0 0.0
    %355 = vmatpush.msra.mxu0 0.0
    %356 = vmatpush.msra.mxu0 0.0
    %357 = vmatpush.msra.mxu0 0.0
    %358 = vmatpush.msra.mxu0 0.0
    %359 = vmatpush.msra.mxu0 0.0
    %360 = vmatpush.msra.mxu0 0.0
    %361 = vmatpush.msra.mxu0 0.0
    %362 = vmatpush.msra.mxu0 0.0
    %363 = vmatpush.msra.mxu0 0.0
    %364 = vmatpush.msra.mxu0 0.0
    %365 = vmatpush.msra.mxu0 0.0
    %366 = vmatpush.msra.mxu0 0.0
    %367 = vmatpush.msra.mxu0 %v352
    %368 = vmatpush.msra.mxu0 %v333
    %369 = vmatpush.msra.mxu0 %v332
    %370 = vmatmul.f32.gmra.mxu0 %v340
    %v371 = vpop.f32.mrf.mxu0
    %v372 = vadd.f32 %v337, %v371
    %373 = vmatmul.f32.gmra.mxu0 %v343
    %v374 = vpop.f32.mrf.mxu0
    %v375 = vadd.f32 %v337, %v374
    %376 = vmatmul.f32.gmra.mxu0 %v346
    %v377 = vpop.f32.mrf.mxu0
    %v378 = vadd.f32 %v337, %v377
    %379 = vmatmul.f32.gmra.mxu0 %v349
    %v380 = vpop.f32.mrf.mxu0
    %v381 = vadd.f32 %v337, %v380
    %382 = vdwg.mxu0
    %vm383 = vcmask 490496
    %v384 = vsel %vm383, %v372, 0.0
    %v385 = vrot.slane %v384, 4
    %v386 = vadd.f32 %v384, %v385
    %v387 = vrot.slane %v386, 2
    %v388 = vadd.f32 %v386, %v387
    %v389 = vrot.slane %v388, 1
    %v390 = vadd.f32 %v388, %v389
    %v391 = vsel %vm383, %v375, 0.0
    %v392 = vrot.slane %v391, 4
    %v393 = vadd.f32 %v391, %v392
    %v394 = vrot.slane %v393, 2
    %v395 = vadd.f32 %v393, %v394
    %v396 = vrot.slane %v395, 1
    %v397 = vadd.f32 %v395, %v396
    %v398 = vsel %vm383, %v378, 0.0
    %v399 = vrot.slane %v398, 4
    %v400 = vadd.f32 %v398, %v399
    %v401 = vrot.slane %v400, 2
    %v402 = vadd.f32 %v400, %v401
    %v403 = vrot.slane %v402, 1
    %v404 = vadd.f32 %v402, %v403
    %v405 = vsel %vm383, %v381, 0.0
    %v406 = vrot.slane %v405, 4
    %v407 = vadd.f32 %v405, %v406
    %v408 = vrot.slane %v407, 2
    %v409 = vadd.f32 %v407, %v408
    %v410 = vrot.slane %v409, 1
    %v411 = vadd.f32 %v409, %v410
    %v412 = vmul.f32 %v372, %v372
    %v413 = vmul.f32 %v375, %v375
    %v414 = vmul.f32 %v378, %v378
    %v415 = vmul.f32 %v381, %v381
    %v416 = vsel %vm383, %v412, 0.0
    %v417 = vrot.slane %v416, 4
    %v418 = vadd.f32 %v416, %v417
    %v419 = vrot.slane %v418, 2
    %v420 = vadd.f32 %v418, %v419
    %v421 = vrot.slane %v420, 1
    %v422 = vadd.f32 %v420, %v421
    %v423 = vsel %vm383, %v413, 0.0
    %v424 = vrot.slane %v423, 4
    %v425 = vadd.f32 %v423, %v424
    %v426 = vrot.slane %v425, 2
    %v427 = vadd.f32 %v425, %v426
    %v428 = vrot.slane %v427, 1
    %v429 = vadd.f32 %v427, %v428
    %v430 = vsel %vm383, %v414, 0.0
    %v431 = vrot.slane %v430, 4
    %v432 = vadd.f32 %v430, %v431
    %v433 = vrot.slane %v432, 2
    %v434 = vadd.f32 %v432, %v433
    %v435 = vrot.slane %v434, 1
    %v436 = vadd.f32 %v434, %v435
    %v437 = vsel %vm383, %v415, 0.0
    %v438 = vrot.slane %v437, 4
    %v439 = vadd.f32 %v437, %v438
    %v440 = vrot.slane %v439, 2
    %v441 = vadd.f32 %v439, %v440
    %v442 = vrot.slane %v441, 1
    %v443 = vadd.f32 %v441, %v442
    %v444 = vmul.f32 %v390, 0.125
    %v445 = vmul.f32 %v397, 0.125
    %v446 = vmul.f32 %v404, 0.125
    %v447 = vmul.f32 %v411, 0.125
    %v448 = vmul.f32 %v390, %v444
    %v449 = vmul.f32 %v397, %v445
    %v450 = vmul.f32 %v404, %v446
    %v451 = vmul.f32 %v411, %v447
    %v452 = vsub.f32 %v422, %v448
    %v453 = vsub.f32 %v429, %v449
    %v454 = vsub.f32 %v436, %v450
    %v455 = vsub.f32 %v443, %v451
    %v456 = vmax.f32 %v452, 0.0
    %v457 = vmax.f32 %v453, 0.0
    %v458 = vmax.f32 %v454, 0.0
    %v459 = vmax.f32 %v455, 0.0
    %v460 = vmul.f32 %v456, 0.14285715
    %v461 = vmul.f32 %v457, 0.14285715
    %v462 = vmul.f32 %v458, 0.14285715
    %v463 = vmul.f32 %v459, 0.14285715
    %v464 = vrsqrt.pop %v460
    %v465 = vmul.f32 %v464, %v460
    %v466 = vmul.f32 %v465, %v464
    %v467 = vmul.f32 0.5, %v466
    %v468 = vsub.f32 1.5, %v467
    %v469 = vmul.f32 %v464, %v468
    %v470 = vmul.f32 %v460, %v469
    %vm471 = vcmp.eq.f32.partialorder %v460, inf
    %v472 = vsel %vm471, %v460, %v470
    %vm473 = vcmp.eq.f32.partialorder %v460, 0.0
    %v474 = vand.u32 %v460, 2147483648
    %v475 = vsel %vm473, %v474, %v472
    %v476 = vrsqrt.pop %v461
    %v477 = vmul.f32 %v476, %v461
    %v478 = vmul.f32 %v477, %v476
    %v479 = vmul.f32 0.5, %v478
    %v480 = vsub.f32 1.5, %v479
    %v481 = vmul.f32 %v476, %v480
    %v482 = vmul.f32 %v461, %v481
    %vm483 = vcmp.eq.f32.partialorder %v461, inf
    %v484 = vsel %vm483, %v461, %v482
    %vm485 = vcmp.eq.f32.partialorder %v461, 0.0
    %v486 = vand.u32 %v461, 2147483648
    %v487 = vsel %vm485, %v486, %v484
    %v488 = vrsqrt.pop %v462
    %v489 = vmul.f32 %v488, %v462
    %v490 = vmul.f32 %v489, %v488
    %v491 = vmul.f32 0.5, %v490
    %v492 = vsub.f32 1.5, %v491
    %v493 = vmul.f32 %v488, %v492
    %v494 = vmul.f32 %v462, %v493
    %vm495 = vcmp.eq.f32.partialorder %v462, inf
    %v496 = vsel %vm495, %v462, %v494
    %vm497 = vcmp.eq.f32.partialorder %v462, 0.0
    %v498 = vand.u32 %v462, 2147483648
    %v499 = vsel %vm497, %v498, %v496
    %v500 = vrsqrt.pop %v463
    %v501 = vmul.f32 %v500, %v463
    %v502 = vmul.f32 %v501, %v500
    %v503 = vmul.f32 0.5, %v502
    %v504 = vsub.f32 1.5, %v503
    %v505 = vmul.f32 %v500, %v504
    %v506 = vmul.f32 %v463, %v505
    %vm507 = vcmp.eq.f32.partialorder %v463, inf
    %v508 = vsel %vm507, %v463, %v506
    %vm509 = vcmp.eq.f32.partialorder %v463, 0.0
    %v510 = vand.u32 %v463, 2147483648
    %v511 = vsel %vm509, %v510, %v508
    %vm516 = vcmask 1041409
    %v517 = vsel %vm516, %v445, %v444
    %vm518 = vcmask 1042434
    %v519 = vsel %vm518, %v446, %v517
    %vm520 = vcmask 1043459
    %v521 = vsel %vm520, %v447, %v519
    %v527 = vsel %vm516, %v487, %v475
    %v528 = vsel %vm518, %v499, %v527
    %v529 = vsel %vm520, %v511, %v528
    %530 = vrot.lane.b32.xlu0 %v529, 60
    %v531 = vpop.permute.xlu0 %530
    %v533 = vsel %vm383, %v521, %v531
    %v534 = vld [vmem:[%s11] sm:$0xff]
    %v535 = vld [vmem:[%s11 + $0x8] sm:$0xff]
    %v536 = vld [vmem:[%s11 + $0x10] sm:$0xff]
    %v537 = vld [vmem:[%s11 + $0x18] sm:$0xff]
    %v538 = vld [vmem:[%s11 + $0x20] sm:$0xff]
    %v539 = vld [vmem:[%s11 + $0x28] sm:$0xff]
    %v540 = vld [vmem:[%s11 + $0x30] sm:$0xff]
    %v541 = vld [vmem:[%s11 + $0x38] sm:$0xff]
    %v542 = vld [vmem:[%s11 + $0x40] sm:$0xff]
    %v543 = vld [vmem:[%s11 + $0x48] sm:$0xff]
    %v544 = vld [vmem:[%s11 + $0x50] sm:$0xff]
    %v545 = vld [vmem:[%s11 + $0x58] sm:$0xff]
    %v546 = vld [vmem:[%s11 + $0x60] sm:$0xff]
    %v547 = vld [vmem:[%s11 + $0x68] sm:$0xff]
    %v548 = vld [vmem:[%s11 + $0x70] sm:$0xff]
    %v549 = vld [vmem:[%s12] sm:$0x1]
    %v551 = vperm.slane %v549, 0
    %vm553 = vcmask 982016
    %v555 = vsel %vm553, %v533, 0
    %557 = vmatpush.msra.mxu0 0.0
    %558 = vmatpush.msra.mxu0 %v548
    %559 = vmatpush.msra.mxu0 %v547
    %560 = vmatpush.msra.mxu0 %v546
    %561 = vmatpush.msra.mxu0 %v545
    %562 = vmatpush.msra.mxu0 %v544
    %563 = vmatpush.msra.mxu0 %v543
    %564 = vmatpush.msra.mxu0 %v542
    %565 = vmatpush.msra.mxu0 %v541
    %566 = vmatpush.msra.mxu0 %v540
    %567 = vmatpush.msra.mxu0 %v539
    %568 = vmatpush.msra.mxu0 %v538
    %569 = vmatpush.msra.mxu0 %v537
    %570 = vmatpush.msra.mxu0 %v536
    %571 = vmatpush.msra.mxu0 %v535
    %572 = vmatpush.msra.mxu0 %v534
    %573 = vmatmul.f32.gmra.mxu0 %v555
    %v574 = vpop.f32.mrf.mxu0
    %v575 = vadd.f32 %v551, %v574
    %576 = vdwg.mxu0
    %v577 = vmax.f32 %v575, 0.0
    %v578 = vld [vmem:[%s13] sm:$0xff]
    %v579 = vld [vmem:[%s13 + $0x8] sm:$0xff]
    %v580 = vld [vmem:[%s13 + $0x10] sm:$0x3f]
    %v581 = vld [vmem:[#allocation2] sm:$0x1]
    %v583 = vperm.slane %v581, 0
    %v586 = vsel %vm172, %v577, 0
    %v589 = vsel %vm185, %v580, 0
    %591 = vmatpush.msra.mxu0 0.0
    %592 = vmatpush.msra.mxu0 0.0
    %593 = vmatpush.msra.mxu0 0.0
    %594 = vmatpush.msra.mxu0 0.0
    %595 = vmatpush.msra.mxu0 0.0
    %596 = vmatpush.msra.mxu0 0.0
    %597 = vmatpush.msra.mxu0 0.0
    %598 = vmatpush.msra.mxu0 0.0
    %599 = vmatpush.msra.mxu0 0.0
    %600 = vmatpush.msra.mxu0 0.0
    %601 = vmatpush.msra.mxu0 0.0
    %602 = vmatpush.msra.mxu0 0.0
    %603 = vmatpush.msra.mxu0 0.0
    %604 = vmatpush.msra.mxu0 %v589
    %605 = vmatpush.msra.mxu0 %v579
    %606 = vmatpush.msra.mxu0 %v578
    %607 = vmatmul.f32.gmra.mxu0 %v586
    %v608 = vpop.f32.mrf.mxu0
    %v609 = vadd.f32 %v583, %v608
    %610 = vdwg.mxu0
    %v611 = vxor.u32 %v609, 2147483648
    %v612 = vmul.f32 %v611, 1.442695
    %v613 = vpow.pop %v612
    %v614 = vadd.f32 %v613, 1.0
    %v615 = vrcp.pop %v614
    %v616 = vmul.f32 %v614, %v615
    %v617 = vsub.f32 1.0, %v616
    %v618 = vmul.f32 %v615, %v617
    %v619 = vadd.f32 %v615, %v618
    %vm620 = vweird.f32 %v614
    %vm621 = vweird.f32 %v615
    %vm622 = vmor %vm620, %vm621
    %v623 = vsel %vm622, %v615, %v619
    %v624 = vand.u32 2147483647, %v614
    %vm625 = vcmp.eq.f32.partialorder %v624, 8.507059e+37
    %v626 = vand.u32 %v614, 2147483648
    %v627 = vor.u32 1.1754944e-38, %v626
    %v628 = vsel %vm625, %v627, %v623
    %v629 = vmul.f32 1.0, %v628
    %631 = vset.pattern.permute.xlu0 0
    %632 = vperm.xlu0 %631, %v629
    %v633 = vpop.permute.xlu0 %632
    %635 = vst [vmem:[#allocation3] sm:$0xf] %v633
    // Predicated region
    $region62: #{tpu_custom_call.1} parent=1 // pred_check
      _
    $region63: #{tpu_custom_call.1} parent=1 // pred_check_branch
      %637 = sbr.rel (0) target = $region65
    $region64: #{tpu_custom_call.1} parent=1 // pred_region
      %639 = vsyncadd [#allocation4], 0
      %s641 = sshll.u32 [#allocation3], 4
      %s642 = int_to_ptr.vmem [resolvable:$true] %s641
      %s643 = sshll.u32 %s15, 4
      %s644 = int_to_ptr.hbm [resolvable:$true] %s643
      %646 = dma.vmem_to_hbm [thread:$0]  %s642, 64, %s644, [#allocation4]
    $region65: #{tpu_custom_call.1} parent=1 // pred_fallthru
      _
    // Predicated region
    $region66: #{tpu_custom_call.1} parent=1 // pred_check
      _
    $region67: #{tpu_custom_call.1} parent=1 // pred_check_branch
      %648 = sbr.rel (0) target = $region69
    $region68: #{tpu_custom_call.1} parent=1 // pred_region
      %650 = dma.done [#allocation4], 64
    $region69: #{tpu_custom_call.1} parent=1 // pred_fallthru
      _
    %651 = vsyncpa [#allocation4], 1

</llo_original>
